<compile_context>
chip_gen: v5e
topology: v5e:2x2
jax: 0.10.0
libtpu: 0.0.40
codegen_flags: <defaults>
</compile_context>

<pallas_src>
import jax
import jax.numpy as jnp
from jax.experimental import pallas as pl
from jax.experimental.pallas import tpu as pltpu


def critic2_kernel(state_ref, action_ref, w4s_ref, w4a_ref, b4_ref,
                   w5_ref, b5_ref, w6_ref, b6_ref, out_ref):
    # Activations -> bf16 on the VPU; weights are already bf16. All dots run
    # bf16 x bf16 on the MXU with f32 accumulation.
    s = state_ref[...].astype(jnp.bfloat16)
    a = action_ref[...].astype(jnp.bfloat16)

    # Layer l4 with the concat fused:  h = relu(state@w4_s + action@w4_a + b4)
    h = jnp.dot(s, w4s_ref[...], preferred_element_type=jnp.float32)
    h = h + jnp.dot(a, w4a_ref[...], preferred_element_type=jnp.float32)
    h = jnp.maximum(h + b4_ref[...], 0.0)

    # Layer l5: (TB, 256) @ (256, 256) + b5, ReLU
    h = jnp.dot(h.astype(jnp.bfloat16), w5_ref[...],
                preferred_element_type=jnp.float32)
    h = jnp.maximum(h + b5_ref[...], 0.0)

    # Layer l6 as VPU multiply + lane reduction instead of an N=1 MXU matmul.
    w6 = w6_ref[...].astype(jnp.float32)                 # (1, 256) — tiny cast
    q = jnp.sum(h * w6, axis=-1, keepdims=True)          # (TB, 1)
    out_ref[...] = (q + b6_ref[0, 0]).astype(out_ref.dtype)


def critic2_forward(state, action, params, *, batch_tile=4096):
    """state: (B, state_dim) f32, action: (B, action_dim) f32 -> (B, 1) f32."""
    B, state_dim = state.shape
    action_dim = action.shape[1]

    # Tile must be a sublane multiple (8 rows, f32).
    batch_tile = max(8, (batch_tile // 8) * 8)
    # Keep >= 2 grid steps whenever B allows it so v7x can shard the parallel
    # batch axis across both TensorCores; for B < 16 a single step is all we
    # can do. No wrapper-side padding: Pallas handles the ragged last block
    # (no cross-row reduction, OOB output rows are dropped on writeback).
    half = ((-(-B // 2)) + 7) // 8 * 8          # ceil(B/2) rounded up to 8
    tb = max(8, min(batch_tile, half))
    grid = (pl.cdiv(B, tb),)

    w4_s, w4_a, b4 = params["w4_s"], params["w4_a"], params["b4"]
    w5, b5 = params["w5"], params["b5"]
    w6, b6 = params["w6"], params["b6"]

    # Weights/biases: constant block index -> DMA'd once, VMEM-resident.
    const = lambda arr: pl.BlockSpec(arr.shape, lambda i: (0,) * arr.ndim)

    compiler_kwargs = {"dimension_semantics": ("parallel",)}
    if tb >= 8192:
        # Only if the caller raises batch_tile; large tiles can brush the
        # 32 MiB scoped-VMEM default (especially on v7x: 64 MiB physical).
        compiler_kwargs["vmem_limit_bytes"] = 64 * 1024 * 1024

    out = pl.pallas_call(
        critic2_kernel,
        out_shape=jax.ShapeDtypeStruct((B, 1), jnp.float32),
        grid=grid,
        in_specs=[
            pl.BlockSpec((tb, state_dim), lambda i: (i, 0)),    # state tile
            pl.BlockSpec((tb, action_dim), lambda i: (i, 0)),   # action tile
            const(w4_s), const(w4_a), const(b4),
            const(w5), const(b5),
            const(w6),
            pl.BlockSpec(memory_space=pltpu.MemorySpace.SMEM),  # b6 scalar
        ],
        out_specs=pl.BlockSpec((tb, 1), lambda i: (i, 0)),
        compiler_params=pltpu.CompilerParams(**compiler_kwargs),
    )(state, action, w4_s, w4_a, b4, w5, b5, w6, b6)

    return out


def init_params(key, state_dim, action_dim):
    """Mimics nn.Linear's U(-1/sqrt(fan_in), 1/sqrt(fan_in)); weights bf16."""
    d_in = state_dim + action_dim
    ks = jax.random.split(key, 6)

    def lin(kw, kb, fan_in, fan_out):
        bound = 1.0 / jnp.sqrt(fan_in)
        # Stored transposed to (fan_in, fan_out) so the kernel does x @ W.
        w = jax.random.uniform(kw, (fan_in, fan_out), jnp.float32, -bound, bound)
        b = jax.random.uniform(kb, (1, fan_out), jnp.float32, -bound, bound)
        return w, b

    w4, b4 = lin(ks[0], ks[1], d_in, 256)
    w5, b5 = lin(ks[2], ks[3], 256, 256)
    w6, b6 = lin(ks[4], ks[5], 256, 1)

    return {
        # w4 pre-split so the concat of (state, action) is fused in the kernel.
        "w4_s": w4[:state_dim].astype(jnp.bfloat16),
        "w4_a": w4[state_dim:].astype(jnp.bfloat16),
        "b4": b4,
        "w5": w5.astype(jnp.bfloat16),
        "b5": b5,
        "w6": w6.T.astype(jnp.bfloat16),   # (1, 256) row for the VPU reduce
        "b6": b6.reshape(1, 1),            # scalar, fed via SMEM
    }


def reference_forward(state, action, params):
    """Pure-JAX reference matching the kernel's bf16-weight / bf16-activation
    MXU compute with f32 accumulation."""
    w4 = jnp.concatenate([params["w4_s"], params["w4_a"]], axis=0)  # bf16
    sa = jnp.concatenate([state, action], axis=1).astype(jnp.bfloat16)
    h = jnp.dot(sa, w4, preferred_element_type=jnp.float32) + params["b4"]
    h = jnp.maximum(h, 0.0)
    h = jnp.dot(h.astype(jnp.bfloat16), params["w5"],
                preferred_element_type=jnp.float32) + params["b5"]
    h = jnp.maximum(h, 0.0)
    q = h @ params["w6"].astype(jnp.float32).T + params["b6"]
    return q


if __name__ == "__main__":
    key = jax.random.PRNGKey(0)
    k_param, k_state, k_action = jax.random.split(key, 3)

    batch, state_dim, action_dim = 8, 24, 8
    params = init_params(k_param, state_dim, action_dim)
    state = jax.random.normal(k_state, (batch, state_dim), jnp.float32)
    action = jax.random.normal(k_action, (batch, action_dim), jnp.float32)

    q2 = critic2_forward(state, action, params)
    q2 = jax.block_until_ready(q2)

    q2_ref = reference_forward(state, action, params)
    assert q2.shape == (batch, 1), q2.shape
    assert jnp.allclose(q2, q2_ref, atol=1e-3, rtol=1e-3), (
        "mismatch vs JAX reference")

    print("KERNEL_OK")
</pallas_src>

<mosaic_0001>
module attributes {stable_mosaic.version = 11 : i64} {
  func.func @critic2_kernel(%arg0: i32, %arg1: memref<8x24xf32, #tpu.memory_space<vmem>>, %arg2: memref<8x8xf32, #tpu.memory_space<vmem>>, %arg3: memref<24x256xbf16, #tpu.memory_space<vmem>>, %arg4: memref<8x256xbf16, #tpu.memory_space<vmem>>, %arg5: memref<1x256xf32, #tpu.memory_space<vmem>>, %arg6: memref<256x256xbf16, #tpu.memory_space<vmem>>, %arg7: memref<1x256xf32, #tpu.memory_space<vmem>>, %arg8: memref<1x256xbf16, #tpu.memory_space<vmem>>, %arg9: memref<1x1xf32, #tpu.memory_space<smem>>, %arg10: memref<8x1xf32, #tpu.memory_space<vmem>>) attributes {dimension_semantics = [#tpu.dimension_semantics<parallel>], iteration_bounds = array<i64: 1>, scalar_prefetch = 0 : i64, scratch_operands = 0 : i64, tpu.core_type = #tpu.core_type<tc>, window_params = [{transform_indices = @transform_0, window_bounds = array<i64: 8, 24>}, {transform_indices = @transform_1, window_bounds = array<i64: 8, 8>}, {pipeline_mode = #tpu.pipeline_mode<synchronous>, transform_indices = @transform_2, window_bounds = array<i64: 24, 256>}, {pipeline_mode = #tpu.pipeline_mode<synchronous>, transform_indices = @transform_3, window_bounds = array<i64: 8, 256>}, {pipeline_mode = #tpu.pipeline_mode<synchronous>, transform_indices = @transform_4, window_bounds = array<i64: 1, 256>}, {pipeline_mode = #tpu.pipeline_mode<synchronous>, transform_indices = @transform_5, window_bounds = array<i64: 256, 256>}, {pipeline_mode = #tpu.pipeline_mode<synchronous>, transform_indices = @transform_6, window_bounds = array<i64: 1, 256>}, {pipeline_mode = #tpu.pipeline_mode<synchronous>, transform_indices = @transform_7, window_bounds = array<i64: 1, 256>}, {transform_indices = @transform_8, window_bounds = array<i64: 1, 1>}, {transform_indices = @transform_9, window_bounds = array<i64: 8, 1>}]} {
    %c0 = arith.constant 0 : index
    %c0_0 = arith.constant 0 : index
    %0 = vector.load %arg1[%c0, %c0_0] : memref<8x24xf32, #tpu.memory_space<vmem>>, vector<8x24xf32>
    %1 = arith.truncf %0 : vector<8x24xf32> to vector<8x24xbf16>
    %c0_1 = arith.constant 0 : index
    %c0_2 = arith.constant 0 : index
    %2 = vector.load %arg2[%c0_1, %c0_2] : memref<8x8xf32, #tpu.memory_space<vmem>>, vector<8x8xf32>
    %3 = arith.truncf %2 : vector<8x8xf32> to vector<8x8xbf16>
    %c0_3 = arith.constant 0 : index
    %c0_4 = arith.constant 0 : index
    %4 = vector.load %arg3[%c0_3, %c0_4] : memref<24x256xbf16, #tpu.memory_space<vmem>>, vector<24x256xbf16>
    %cst = arith.constant dense<0.000000e+00> : vector<8x256xf32>
    %5 = tpu.matmul %1, %4, %cst {dimension_numbers = #tpu.dot_dimension_numbers<[1], [0], [0], [1], [0, 0, 1, 1], [], []>} : vector<8x24xbf16>, vector<24x256xbf16>, vector<8x256xf32> -> vector<8x256xf32>
    %c0_5 = arith.constant 0 : index
    %c0_6 = arith.constant 0 : index
    %6 = vector.load %arg4[%c0_5, %c0_6] : memref<8x256xbf16, #tpu.memory_space<vmem>>, vector<8x256xbf16>
    %cst_7 = arith.constant dense<0.000000e+00> : vector<8x256xf32>
    %7 = tpu.matmul %3, %6, %cst_7 {dimension_numbers = #tpu.dot_dimension_numbers<[1], [0], [0], [1], [0, 0, 1, 1], [], []>} : vector<8x8xbf16>, vector<8x256xbf16>, vector<8x256xf32> -> vector<8x256xf32>
    %8 = arith.addf %5, %7 : vector<8x256xf32>
    %c0_8 = arith.constant 0 : index
    %c0_9 = arith.constant 0 : index
    %9 = vector.load %arg5[%c0_8, %c0_9] : memref<1x256xf32, #tpu.memory_space<vmem>>, vector<1x256xf32>
    %10 = vector.broadcast %9 : vector<1x256xf32> to vector<8x256xf32>
    %11 = arith.addf %8, %10 : vector<8x256xf32>
    %cst_10 = arith.constant 0.000000e+00 : f32
    %12 = vector.broadcast %cst_10 : f32 to vector<8x256xf32>
    %13 = arith.maximumf %11, %12 : vector<8x256xf32>
    %14 = arith.truncf %13 : vector<8x256xf32> to vector<8x256xbf16>
    %c0_11 = arith.constant 0 : index
    %c0_12 = arith.constant 0 : index
    %15 = vector.load %arg6[%c0_11, %c0_12] : memref<256x256xbf16, #tpu.memory_space<vmem>>, vector<256x256xbf16>
    %cst_13 = arith.constant dense<0.000000e+00> : vector<8x256xf32>
    %16 = tpu.matmul %14, %15, %cst_13 {dimension_numbers = #tpu.dot_dimension_numbers<[1], [0], [0], [1], [0, 0, 1, 1], [], []>} : vector<8x256xbf16>, vector<256x256xbf16>, vector<8x256xf32> -> vector<8x256xf32>
    %c0_14 = arith.constant 0 : index
    %c0_15 = arith.constant 0 : index
    %17 = vector.load %arg7[%c0_14, %c0_15] : memref<1x256xf32, #tpu.memory_space<vmem>>, vector<1x256xf32>
    %18 = vector.broadcast %17 : vector<1x256xf32> to vector<8x256xf32>
    %19 = arith.addf %16, %18 : vector<8x256xf32>
    %cst_16 = arith.constant 0.000000e+00 : f32
    %20 = vector.broadcast %cst_16 : f32 to vector<8x256xf32>
    %21 = arith.maximumf %19, %20 : vector<8x256xf32>
    %c0_17 = arith.constant 0 : index
    %c0_18 = arith.constant 0 : index
    %22 = vector.load %arg8[%c0_17, %c0_18] : memref<1x256xbf16, #tpu.memory_space<vmem>>, vector<1x256xbf16>
    %23 = arith.extf %22 : vector<1x256xbf16> to vector<1x256xf32>
    %24 = vector.broadcast %23 : vector<1x256xf32> to vector<8x256xf32>
    %25 = arith.mulf %21, %24 : vector<8x256xf32>
    %cst_19 = arith.constant dense<0.000000e+00> : vector<8xf32>
    %26 = vector.multi_reduction <add>, %25, %cst_19 [1] : vector<8x256xf32> to vector<8xf32>
    %27 = vector.shape_cast %26 : vector<8xf32> to vector<8x1xf32>
    %c0_20 = arith.constant 0 : index
    %c0_21 = arith.constant 0 : index
    %28 = memref.load %arg9[%c0_20, %c0_21] : memref<1x1xf32, #tpu.memory_space<smem>>
    %29 = vector.broadcast %28 : f32 to vector<8x1xf32>
    %30 = arith.addf %27, %29 : vector<8x1xf32>
    %c0_22 = arith.constant 0 : index
    %c0_23 = arith.constant 0 : index
    %31 = vector.load %arg10[%c0_22, %c0_23] : memref<8x1xf32, #tpu.memory_space<vmem>>, vector<8x1xf32>
    tpu.vector_store %arg10[%c0_22, %c0_23], %30 {strides = array<i32>} : memref<8x1xf32, #tpu.memory_space<vmem>>, vector<8x1xf32>,
    return
  }
  func.func @transform_0(%arg0: i32) -> (i32, i32) {
    %c0_i32 = arith.constant 0 : i32
    %c0_i32_0 = arith.constant 0 : i32
    return %arg0, %c0_i32 : i32, i32
  }
  func.func @transform_1(%arg0: i32) -> (i32, i32) {
    %c0_i32 = arith.constant 0 : i32
    %c0_i32_0 = arith.constant 0 : i32
    return %arg0, %c0_i32 : i32, i32
  }
  func.func @transform_2(%arg0: i32) -> (i32, i32) {
    %c0_i32 = arith.constant 0 : i32
    %c0_i32_0 = arith.constant 0 : i32
    %c0_i32_1 = arith.constant 0 : i32
    return %c0_i32, %c0_i32_0 : i32, i32
  }
  func.func @transform_3(%arg0: i32) -> (i32, i32) {
    %c0_i32 = arith.constant 0 : i32
    %c0_i32_0 = arith.constant 0 : i32
    %c0_i32_1 = arith.constant 0 : i32
    return %c0_i32, %c0_i32_0 : i32, i32
  }
  func.func @transform_4(%arg0: i32) -> (i32, i32) {
    %c0_i32 = arith.constant 0 : i32
    %c0_i32_0 = arith.constant 0 : i32
    %c0_i32_1 = arith.constant 0 : i32
    return %c0_i32, %c0_i32_0 : i32, i32
  }
  func.func @transform_5(%arg0: i32) -> (i32, i32) {
    %c0_i32 = arith.constant 0 : i32
    %c0_i32_0 = arith.constant 0 : i32
    %c0_i32_1 = arith.constant 0 : i32
    return %c0_i32, %c0_i32_0 : i32, i32
  }
  func.func @transform_6(%arg0: i32) -> (i32, i32) {
    %c0_i32 = arith.constant 0 : i32
    %c0_i32_0 = arith.constant 0 : i32
    %c0_i32_1 = arith.constant 0 : i32
    return %c0_i32, %c0_i32_0 : i32, i32
  }
  func.func @transform_7(%arg0: i32) -> (i32, i32) {
    %c0_i32 = arith.constant 0 : i32
    %c0_i32_0 = arith.constant 0 : i32
    %c0_i32_1 = arith.constant 0 : i32
    return %c0_i32, %c0_i32_0 : i32, i32
  }
  func.func @transform_8(%arg0: i32) -> (i32, i32) {
    %c0_i32 = arith.constant 0 : i32
    %c0_i32_0 = arith.constant 0 : i32
    %c0_i32_1 = arith.constant 0 : i32
    return %c0_i32, %c0_i32_0 : i32, i32
  }
  func.func @transform_9(%arg0: i32) -> (i32, i32) {
    %c0_i32 = arith.constant 0 : i32
    %c0_i32_0 = arith.constant 0 : i32
    return %arg0, %c0_i32 : i32, i32
  }
}

</mosaic_0001>

<llo_original>
// kernel: tpu_custom_call.1
$region0: #{tpu_custom_call.1}
  #allocation0 [shape = 'u32[]', space=smem, size = 0x4, offset = 0x4, fixed_abs, tag = 'smem constant byte address 0x4 - core index']
  #allocation1 [shape = 'u32[72,128]{1,0:T(1,128)}', space=vmem, size = 0x9000, scoped, tag = 'internal scratch']
  #allocation2 [shape = 'f32[1,1]{1,0:T(1,128)S(6)}', space=smem, size = 0x200, scoped, tag = 'scoped memory for tpu_custom_call.1']
  %s0 = inlined_call_operand.hbm [shape: f32[8,24], index: 0, kind: input, shape index: {}]
  %s1 = inlined_call_operand.hbm [shape: f32[8,8], index: 1, kind: input, shape index: {}]
  %s2 = inlined_call_operand.hbm [shape: bf16[24,256], index: 2, kind: input, shape index: {}]
  %s3 = inlined_call_operand.hbm [shape: bf16[8,256], index: 3, kind: input, shape index: {}]
  %s4 = inlined_call_operand.vmem [shape: f32[1,256], index: 4, kind: input, shape index: {}]
  %s5 = inlined_call_operand.hbm [shape: bf16[256,256], index: 5, kind: input, shape index: {}]
  %s6 = inlined_call_operand.vmem [shape: f32[1,256], index: 6, kind: input, shape index: {}]
  %s7 = inlined_call_operand.vmem [shape: bf16[1,256], index: 7, kind: input, shape index: {}]
  %s8 = inlined_call_operand.<no memory space> [shape: f32[1,1], index: 8, kind: input, shape index: {}]
  %s9 = inlined_call_operand.vmem [shape: f32[8,1], index: 9, kind: output, shape index: {}]
  %s10 = sld [smem:[#allocation0]]
  $region66: #{tpu_custom_call.1} parent=0
    _
  %s12 = ssub.s32 1, %s10
  %s13 = scalar_select 0, %s12, %s10
  %14 = sst [smem:[#allocation2]] %s8
  $region1: #{tpu_custom_call.1} parent=0
    #allocation3 [shape = 'u8[4096]{0}', space=vmem, size = 0x1000, scoped, tag = 'input window, operand 0, single buffered']
    #allocation4 [shape = 's32[1]{0}', space=sflag, size = 0x4, scoped, tag = 'scoped memory for tpu_custom_call.1']
    #allocation5 [shape = 'u8[4096]{0}', space=vmem, size = 0x1000, scoped, tag = 'input window, operand 1, single buffered']
    #allocation6 [shape = 's32[1]{0}', space=sflag, size = 0x4, scoped, tag = 'scoped memory for tpu_custom_call.1']
    #allocation7 [shape = 'u8[12288]{0}', space=vmem, size = 0x3000, scoped, tag = 'input window, operand 2, single buffered']
    #allocation8 [shape = 'u8[4096]{0}', space=vmem, size = 0x1000, scoped, tag = 'input window, operand 3, single buffered']
    #allocation9 [shape = 's32[1]{0}', space=sflag, size = 0x4, scoped, tag = 'scoped memory for tpu_custom_call.1']
    #allocation10 [shape = 'u8[131072]{0}', space=vmem, size = 0x20000, scoped, tag = 'input window, operand 5, single buffered']
    %15 = vsyncpa [#allocation4], 0
    %16 = vsyncpa [#allocation6], 0
    %17 = vsyncpa [#allocation9], 0
    // Predicated region
    $region2: #{tpu_custom_call.1} parent=1 // pred_check
      _
    $region3: #{tpu_custom_call.1} parent=1 // pred_check_branch
      %19 = sbr.rel (0) target = $region5
    $region4: #{tpu_custom_call.1} parent=1 // pred_region
      %21 = vsyncadd [#allocation4], 0
      %s23 = sshll.u32 %s0, 4
      %s24 = int_to_ptr.hbm [resolvable:$true] %s23
      %s25 = sshll.u32 [#allocation3], 4
      %s26 = int_to_ptr.vmem [resolvable:$true] %s25
      %28 = dma.hbm_to_vmem [thread:$0]  %s24, 128, %s26, [#allocation4]
    $region5: #{tpu_custom_call.1} parent=1 // pred_fallthru
      _
    // Predicated region
    $region6: #{tpu_custom_call.1} parent=1 // pred_check
      _
    $region7: #{tpu_custom_call.1} parent=1 // pred_check_branch
      %30 = sbr.rel (0) target = $region9
    $region8: #{tpu_custom_call.1} parent=1 // pred_region
      %32 = vsyncadd [#allocation6], 0
      %s34 = sshll.u32 %s1, 4
      %s35 = int_to_ptr.hbm [resolvable:$true] %s34
      %s36 = sshll.u32 [#allocation5], 4
      %s37 = int_to_ptr.vmem [resolvable:$true] %s36
      %39 = dma.hbm_to_vmem [thread:$0]  %s35, 128, %s37, [#allocation6]
    $region9: #{tpu_custom_call.1} parent=1 // pred_fallthru
      _
    // Predicated region
    $region10: #{tpu_custom_call.1} parent=1 // pred_check
      _
    $region11: #{tpu_custom_call.1} parent=1 // pred_check_branch
      %41 = sbr.rel (0) target = $region13
    $region12: #{tpu_custom_call.1} parent=1 // pred_region
      %43 = vsyncadd [#allocation6], 0
      %s44 = sshll.u32 %s2, 4
      %s45 = int_to_ptr.hbm [resolvable:$true] %s44
      %s46 = sshll.u32 [#allocation7], 4
      %s47 = int_to_ptr.vmem [resolvable:$true] %s46
      %52 = dma.hbm_to_vmem [thread:$0]  %s45, 384, %s47, [#allocation6], 128, 128, 8
    $region13: #{tpu_custom_call.1} parent=1 // pred_fallthru
      _
    // Predicated region
    $region14: #{tpu_custom_call.1} parent=1 // pred_check
      _
    $region15: #{tpu_custom_call.1} parent=1 // pred_check_branch
      %54 = sbr.rel (0) target = $region17
    $region16: #{tpu_custom_call.1} parent=1 // pred_region
      %56 = vsyncadd [#allocation9], 0
      %s58 = sshll.u32 %s3, 4
      %s59 = int_to_ptr.hbm [resolvable:$true] %s58
      %s60 = sshll.u32 [#allocation8], 4
      %s61 = int_to_ptr.vmem [resolvable:$true] %s60
      %63 = dma.hbm_to_vmem [thread:$0]  %s59, 128, %s61, [#allocation9]
    $region17: #{tpu_custom_call.1} parent=1 // pred_fallthru
      _
    // Predicated region
    $region18: #{tpu_custom_call.1} parent=1 // pred_check
      _
    $region19: #{tpu_custom_call.1} parent=1 // pred_check_branch
      %65 = sbr.rel (0) target = $region21
    $region20: #{tpu_custom_call.1} parent=1 // pred_region
      _
    $region21: #{tpu_custom_call.1} parent=1 // pred_fallthru
      _
    // Predicated region
    $region22: #{tpu_custom_call.1} parent=1 // pred_check
      _
    $region23: #{tpu_custom_call.1} parent=1 // pred_check_branch
      %67 = sbr.rel (0) target = $region25
    $region24: #{tpu_custom_call.1} parent=1 // pred_region
      %69 = vsyncadd [#allocation9], 0
      %s70 = sshll.u32 %s5, 4
      %s71 = int_to_ptr.hbm [resolvable:$true] %s70
      %s72 = sshll.u32 [#allocation10], 4
      %s73 = int_to_ptr.vmem [resolvable:$true] %s72
      %78 = dma.hbm_to_vmem [thread:$0]  %s71, 4096, %s73, [#allocation9], 128, 128, 8
    $region25: #{tpu_custom_call.1} parent=1 // pred_fallthru
      _
    // Predicated region
    $region26: #{tpu_custom_call.1} parent=1 // pred_check
      _
    $region27: #{tpu_custom_call.1} parent=1 // pred_check_branch
      %80 = sbr.rel (0) target = $region29
    $region28: #{tpu_custom_call.1} parent=1 // pred_region
      _
    $region29: #{tpu_custom_call.1} parent=1 // pred_fallthru
      _
    // Predicated region
    $region30: #{tpu_custom_call.1} parent=1 // pred_check
      _
    $region31: #{tpu_custom_call.1} parent=1 // pred_check_branch
      %82 = sbr.rel (0) target = $region33
    $region32: #{tpu_custom_call.1} parent=1 // pred_region
      _
    $region33: #{tpu_custom_call.1} parent=1 // pred_fallthru
      _
    // Predicated region
    $region34: #{tpu_custom_call.1} parent=1 // pred_check
      _
    $region35: #{tpu_custom_call.1} parent=1 // pred_check_branch
      %84 = sbr.rel (0) target = $region37
    $region36: #{tpu_custom_call.1} parent=1 // pred_region
      _
    $region37: #{tpu_custom_call.1} parent=1 // pred_fallthru
      _
    // Predicated region
    $region38: #{tpu_custom_call.1} parent=1 // pred_check
      _
    $region39: #{tpu_custom_call.1} parent=1 // pred_check_branch
      %86 = sbr.rel (0) target = $region41
    $region40: #{tpu_custom_call.1} parent=1 // pred_region
      %88 = dma.done [#allocation4], 128
    $region41: #{tpu_custom_call.1} parent=1 // pred_fallthru
      _
    // Predicated region
    $region42: #{tpu_custom_call.1} parent=1 // pred_check
      _
    $region43: #{tpu_custom_call.1} parent=1 // pred_check_branch
      %90 = sbr.rel (0) target = $region45
    $region44: #{tpu_custom_call.1} parent=1 // pred_region
      %92 = dma.done [#allocation6], 128
    $region45: #{tpu_custom_call.1} parent=1 // pred_fallthru
      _
    // Predicated region
    $region46: #{tpu_custom_call.1} parent=1 // pred_check
      _
    $region47: #{tpu_custom_call.1} parent=1 // pred_check_branch
      %94 = sbr.rel (0) target = $region49
    $region48: #{tpu_custom_call.1} parent=1 // pred_region
      %96 = dma.done [#allocation6], 384
    $region49: #{tpu_custom_call.1} parent=1 // pred_fallthru
      _
    // Predicated region
    $region50: #{tpu_custom_call.1} parent=1 // pred_check
      _
    $region51: #{tpu_custom_call.1} parent=1 // pred_check_branch
      %98 = sbr.rel (0) target = $region53
    $region52: #{tpu_custom_call.1} parent=1 // pred_region
      %100 = dma.done [#allocation9], 128
    $region53: #{tpu_custom_call.1} parent=1 // pred_fallthru
      _
    // Predicated region
    $region54: #{tpu_custom_call.1} parent=1 // pred_check
      _
    $region55: #{tpu_custom_call.1} parent=1 // pred_check_branch
      %102 = sbr.rel (0) target = $region57
    $region56: #{tpu_custom_call.1} parent=1 // pred_region
      %104 = dma.done [#allocation9], 4096
    $region57: #{tpu_custom_call.1} parent=1 // pred_fallthru
      _
    %v106 = vld [vmem:[#allocation3] sm:$0xff]
    %v107 = vpack.c.bf16 %v106, %v106
    %v108 = vld [vmem:[#allocation5] sm:$0xff]
    %v109 = vpack.c.bf16 %v108, %v108
    %v110 = vld [vmem:[#allocation7] sm:$0xff]
    %v111 = vld [vmem:[#allocation7 + $0x8] sm:$0xff]
    %v112 = vld [vmem:[#allocation7 + $0x10] sm:$0xff]
    %v113 = vld [vmem:[#allocation8] sm:$0xff]
    %v115 = vunpack.c.l.b16 %v113
    %v116 = vunpack.c.h.b16 %v113
    %v117 = vpack.c.b16 %v115, %v115
    %v118 = vpack.c.b16 %v116, %v116
    %vm119 = vcmask 64512
    %v121 = vsel %vm119, %v109, 0
    %vm123 = vcmask 1043456
    %v125 = vsel %vm123, %v117, 0
    %v128 = vsel %vm123, %v118, 0
    %130 = vmatpush.bf16.msra.mxu0 0
    %131 = vmatpush.bf16.msra.mxu0 0
    %132 = vmatpush.bf16.msra.mxu0 0
    %133 = vmatpush.bf16.msra.mxu0 0
    %134 = vmatpush.bf16.msra.mxu0 0
    %135 = vmatpush.bf16.msra.mxu0 0
    %136 = vmatpush.bf16.msra.mxu0 0
    %137 = vmatpush.bf16.msra.mxu0 %v125
    %138 = vmatmul.bf16.gmra.mxu0 %v121
    %v139 = vpop.f32.mrf.mxu0
    %v140 = vadd.f32 0.0, %v139
    %v141 = vpop.f32.mrf.mxu0
    %142 = vdwg.mxu0
    %143 = vmatpush.bf16.msra.mxu0 0
    %144 = vmatpush.bf16.msra.mxu0 0
    %145 = vmatpush.bf16.msra.mxu0 0
    %146 = vmatpush.bf16.msra.mxu0 0
    %147 = vmatpush.bf16.msra.mxu0 0
    %148 = vmatpush.bf16.msra.mxu0 0
    %149 = vmatpush.bf16.msra.mxu0 0
    %150 = vmatpush.bf16.msra.mxu0 %v128
    %151 = vmatmul.bf16.gmra.mxu0 %v121
    %v152 = vpop.f32.mrf.mxu0
    %v153 = vadd.f32 0.0, %v152
    %v154 = vpop.f32.mrf.mxu0
    %155 = vdwg.mxu0
    %v159 = vunpack.c.l.b16 %v110
    %v160 = vunpack.c.h.b16 %v110
    %v161 = vunpack.c.l.b16 %v111
    %v162 = vunpack.c.h.b16 %v111
    %v163 = vunpack.c.l.b16 %v112
    %v164 = vunpack.c.h.b16 %v112
    %v165 = vpack.c.b16 %v161, %v159
    %v166 = vpack.c.b16 %v162, %v160
    %v167 = vpack.c.b16 %v163, %v163
    %v168 = vpack.c.b16 %v164, %v164
    %vm171 = vcmask 195584
    %v173 = vsel %vm171, %v107, 0
    %v176 = vsel %vm123, %v167, 0
    %v179 = vsel %vm123, %v168, 0
    %181 = vmatpush.bf16.msra.mxu0 0
    %182 = vmatpush.bf16.msra.mxu0 0
    %183 = vmatpush.bf16.msra.mxu0 0
    %184 = vmatpush.bf16.msra.mxu0 0
    %185 = vmatpush.bf16.msra.mxu0 0
    %186 = vmatpush.bf16.msra.mxu0 0
    %187 = vmatpush.bf16.msra.mxu0 %v176
    %188 = vmatpush.bf16.msra.mxu0 %v165
    %189 = vmatmul.bf16.gmra.mxu0 %v173
    %v190 = vpop.f32.mrf.mxu0
    %v191 = vadd.f32 %v140, %v190
    %v192 = vpop.f32.mrf.mxu0
    %193 = vdwg.mxu0
    %194 = vmatpush.bf16.msra.mxu0 0
    %195 = vmatpush.bf16.msra.mxu0 0
    %196 = vmatpush.bf16.msra.mxu0 0
    %197 = vmatpush.bf16.msra.mxu0 0
    %198 = vmatpush.bf16.msra.mxu0 0
    %199 = vmatpush.bf16.msra.mxu0 0
    %200 = vmatpush.bf16.msra.mxu0 %v179
    %201 = vmatpush.bf16.msra.mxu0 %v166
    %202 = vmatmul.bf16.gmra.mxu0 %v173
    %v203 = vpop.f32.mrf.mxu0
    %v204 = vadd.f32 %v153, %v203
    %v205 = vpop.f32.mrf.mxu0
    %206 = vdwg.mxu0
    %v207 = vld [vmem:[%s4] sm:$0x3]
    %v209 = vperm.slane %v207, 0
    %v210 = vperm.slane %v207, 1
    %v213 = vadd.f32 %v191, %v209
    %v214 = vadd.f32 %v204, %v210
    %v215 = vmax.f32 %v213, 0.0
    %v216 = vmax.f32 %v214, 0.0
    %v217 = vpack.c.bf16 %v215, %v215
    %v218 = vpack.c.bf16 %v216, %v216
    %v219 = vld [vmem:[#allocation10] sm:$0xff]
    %v220 = vld [vmem:[#allocation10 + $0x8] sm:$0xff]
    %v221 = vld [vmem:[#allocation10 + $0x10] sm:$0xff]
    %v222 = vld [vmem:[#allocation10 + $0x18] sm:$0xff]
    %v223 = vld [vmem:[#allocation10 + $0x20] sm:$0xff]
    %v224 = vld [vmem:[#allocation10 + $0x28] sm:$0xff]
    %v225 = vld [vmem:[#allocation10 + $0x30] sm:$0xff]
    %v226 = vld [vmem:[#allocation10 + $0x38] sm:$0xff]
    %v227 = vld [vmem:[#allocation10 + $0x40] sm:$0xff]
    %v228 = vld [vmem:[#allocation10 + $0x48] sm:$0xff]
    %v229 = vld [vmem:[#allocation10 + $0x50] sm:$0xff]
    %v230 = vld [vmem:[#allocation10 + $0x58] sm:$0xff]
    %v231 = vld [vmem:[#allocation10 + $0x60] sm:$0xff]
    %v232 = vld [vmem:[#allocation10 + $0x68] sm:$0xff]
    %v233 = vld [vmem:[#allocation10 + $0x70] sm:$0xff]
    %v234 = vld [vmem:[#allocation10 + $0x78] sm:$0xff]
    %v235 = vld [vmem:[#allocation10 + $0x80] sm:$0xff]
    %v236 = vld [vmem:[#allocation10 + $0x88] sm:$0xff]
    %v237 = vld [vmem:[#allocation10 + $0x90] sm:$0xff]
    %v238 = vld [vmem:[#allocation10 + $0x98] sm:$0xff]
    %v239 = vld [vmem:[#allocation10 + $0xa0] sm:$0xff]
    %v240 = vld [vmem:[#allocation10 + $0xa8] sm:$0xff]
    %v241 = vld [vmem:[#allocation10 + $0xb0] sm:$0xff]
    %v242 = vld [vmem:[#allocation10 + $0xb8] sm:$0xff]
    %v243 = vld [vmem:[#allocation10 + $0xc0] sm:$0xff]
    %v244 = vld [vmem:[#allocation10 + $0xc8] sm:$0xff]
    %v245 = vld [vmem:[#allocation10 + $0xd0] sm:$0xff]
    %v246 = vld [vmem:[#allocation10 + $0xd8] sm:$0xff]
    %v247 = vld [vmem:[#allocation10 + $0xe0] sm:$0xff]
    %v248 = vld [vmem:[#allocation10 + $0xe8] sm:$0xff]
    %v249 = vld [vmem:[#allocation10 + $0xf0] sm:$0xff]
    %v250 = vld [vmem:[#allocation10 + $0xf8] sm:$0xff]
    %v251 = vld [vmem:[%s6] sm:$0x3]
    %v253 = vperm.slane %v251, 0
    %v254 = vperm.slane %v251, 1
    %v289 = vunpack.c.l.b16 %v219
    %v290 = vunpack.c.h.b16 %v219
    %v291 = vunpack.c.l.b16 %v220
    %v292 = vunpack.c.h.b16 %v220
    %v293 = vunpack.c.l.b16 %v221
    %v294 = vunpack.c.h.b16 %v221
    %v295 = vunpack.c.l.b16 %v222
    %v296 = vunpack.c.h.b16 %v222
    %v297 = vunpack.c.l.b16 %v223
    %v298 = vunpack.c.h.b16 %v223
    %v299 = vunpack.c.l.b16 %v224
    %v300 = vunpack.c.h.b16 %v224
    %v301 = vunpack.c.l.b16 %v225
    %v302 = vunpack.c.h.b16 %v225
    %v303 = vunpack.c.l.b16 %v226
    %v304 = vunpack.c.h.b16 %v226
    %v305 = vunpack.c.l.b16 %v227
    %v306 = vunpack.c.h.b16 %v227
    %v307 = vunpack.c.l.b16 %v228
    %v308 = vunpack.c.h.b16 %v228
    %v309 = vunpack.c.l.b16 %v229
    %v310 = vunpack.c.h.b16 %v229
    %v311 = vunpack.c.l.b16 %v230
    %v312 = vunpack.c.h.b16 %v230
    %v313 = vunpack.c.l.b16 %v231
    %v314 = vunpack.c.h.b16 %v231
    %v315 = vunpack.c.l.b16 %v232
    %v316 = vunpack.c.h.b16 %v232
    %v317 = vunpack.c.l.b16 %v233
    %v318 = vunpack.c.h.b16 %v233
    %v319 = vunpack.c.l.b16 %v234
    %v320 = vunpack.c.h.b16 %v234
    %v321 = vunpack.c.l.b16 %v235
    %v322 = vunpack.c.h.b16 %v235
    %v323 = vunpack.c.l.b16 %v236
    %v324 = vunpack.c.h.b16 %v236
    %v325 = vunpack.c.l.b16 %v237
    %v326 = vunpack.c.h.b16 %v237
    %v327 = vunpack.c.l.b16 %v238
    %v328 = vunpack.c.h.b16 %v238
    %v329 = vunpack.c.l.b16 %v239
    %v330 = vunpack.c.h.b16 %v239
    %v331 = vunpack.c.l.b16 %v240
    %v332 = vunpack.c.h.b16 %v240
    %v333 = vunpack.c.l.b16 %v241
    %v334 = vunpack.c.h.b16 %v241
    %v335 = vunpack.c.l.b16 %v242
    %v336 = vunpack.c.h.b16 %v242
    %v337 = vunpack.c.l.b16 %v243
    %v338 = vunpack.c.h.b16 %v243
    %v339 = vunpack.c.l.b16 %v244
    %v340 = vunpack.c.h.b16 %v244
    %v341 = vunpack.c.l.b16 %v245
    %v342 = vunpack.c.h.b16 %v245
    %v343 = vunpack.c.l.b16 %v246
    %v344 = vunpack.c.h.b16 %v246
    %v345 = vunpack.c.l.b16 %v247
    %v346 = vunpack.c.h.b16 %v247
    %v347 = vunpack.c.l.b16 %v248
    %v348 = vunpack.c.h.b16 %v248
    %v349 = vunpack.c.l.b16 %v249
    %v350 = vunpack.c.h.b16 %v249
    %v351 = vunpack.c.l.b16 %v250
    %v352 = vunpack.c.h.b16 %v250
    %v353 = vpack.c.b16 %v291, %v289
    %v354 = vpack.c.b16 %v292, %v290
    %v355 = vpack.c.b16 %v295, %v293
    %v356 = vpack.c.b16 %v296, %v294
    %v357 = vpack.c.b16 %v299, %v297
    %v358 = vpack.c.b16 %v300, %v298
    %v359 = vpack.c.b16 %v303, %v301
    %v360 = vpack.c.b16 %v304, %v302
    %v361 = vpack.c.b16 %v307, %v305
    %v362 = vpack.c.b16 %v308, %v306
    %v363 = vpack.c.b16 %v311, %v309
    %v364 = vpack.c.b16 %v312, %v310
    %v365 = vpack.c.b16 %v315, %v313
    %v366 = vpack.c.b16 %v316, %v314
    %v367 = vpack.c.b16 %v319, %v317
    %v368 = vpack.c.b16 %v320, %v318
    %v369 = vpack.c.b16 %v323, %v321
    %v370 = vpack.c.b16 %v324, %v322
    %v371 = vpack.c.b16 %v327, %v325
    %v372 = vpack.c.b16 %v328, %v326
    %v373 = vpack.c.b16 %v331, %v329
    %v374 = vpack.c.b16 %v332, %v330
    %v375 = vpack.c.b16 %v335, %v333
    %v376 = vpack.c.b16 %v336, %v334
    %v377 = vpack.c.b16 %v339, %v337
    %v378 = vpack.c.b16 %v340, %v338
    %v379 = vpack.c.b16 %v343, %v341
    %v380 = vpack.c.b16 %v344, %v342
    %v381 = vpack.c.b16 %v347, %v345
    %v382 = vpack.c.b16 %v348, %v346
    %v383 = vpack.c.b16 %v351, %v349
    %v384 = vpack.c.b16 %v352, %v350
    %417 = vmatpush.bf16.msra.mxu0 %v367
    %418 = vmatpush.bf16.msra.mxu0 %v365
    %419 = vmatpush.bf16.msra.mxu0 %v363
    %420 = vmatpush.bf16.msra.mxu0 %v361
    %421 = vmatpush.bf16.msra.mxu0 %v359
    %422 = vmatpush.bf16.msra.mxu0 %v357
    %423 = vmatpush.bf16.msra.mxu0 %v355
    %424 = vmatpush.bf16.msra.mxu0 %v353
    %425 = vmatmul.bf16.gmra.mxu0 %v217
    %v426 = vpop.f32.mrf.mxu0
    %v427 = vadd.f32 %v253, %v426
    %v428 = vpop.f32.mrf.mxu0
    %429 = vdwg.mxu0
    %430 = vmatpush.bf16.msra.mxu0 %v383
    %431 = vmatpush.bf16.msra.mxu0 %v381
    %432 = vmatpush.bf16.msra.mxu0 %v379
    %433 = vmatpush.bf16.msra.mxu0 %v377
    %434 = vmatpush.bf16.msra.mxu0 %v375
    %435 = vmatpush.bf16.msra.mxu0 %v373
    %436 = vmatpush.bf16.msra.mxu0 %v371
    %437 = vmatpush.bf16.msra.mxu0 %v369
    %438 = vmatmul.bf16.gmra.mxu0 %v218
    %v439 = vpop.f32.mrf.mxu0
    %v440 = vadd.f32 %v427, %v439
    %v441 = vpop.f32.mrf.mxu0
    %442 = vdwg.mxu0
    %443 = vmatpush.bf16.msra.mxu0 %v368
    %444 = vmatpush.bf16.msra.mxu0 %v366
    %445 = vmatpush.bf16.msra.mxu0 %v364
    %446 = vmatpush.bf16.msra.mxu0 %v362
    %447 = vmatpush.bf16.msra.mxu0 %v360
    %448 = vmatpush.bf16.msra.mxu0 %v358
    %449 = vmatpush.bf16.msra.mxu0 %v356
    %450 = vmatpush.bf16.msra.mxu0 %v354
    %451 = vmatmul.bf16.gmra.mxu0 %v217
    %v452 = vpop.f32.mrf.mxu0
    %v453 = vadd.f32 %v254, %v452
    %v454 = vpop.f32.mrf.mxu0
    %455 = vdwg.mxu0
    %456 = vmatpush.bf16.msra.mxu0 %v384
    %457 = vmatpush.bf16.msra.mxu0 %v382
    %458 = vmatpush.bf16.msra.mxu0 %v380
    %459 = vmatpush.bf16.msra.mxu0 %v378
    %460 = vmatpush.bf16.msra.mxu0 %v376
    %461 = vmatpush.bf16.msra.mxu0 %v374
    %462 = vmatpush.bf16.msra.mxu0 %v372
    %463 = vmatpush.bf16.msra.mxu0 %v370
    %464 = vmatmul.bf16.gmra.mxu0 %v218
    %v465 = vpop.f32.mrf.mxu0
    %v466 = vadd.f32 %v453, %v465
    %v467 = vpop.f32.mrf.mxu0
    %468 = vdwg.mxu0
    %v469 = vmax.f32 %v440, 0.0
    %v470 = vmax.f32 %v466, 0.0
    %v471 = vld [vmem:[%s7] sm:$0x3]
    %v472 = vunpack.c.l.bf16 %v471
    %v474 = vperm.slane %v472, 0
    %v475 = vperm.slane %v472, 2
    %v478 = vperm.slane %v474, 0
    %v479 = vperm.slane %v475, 0
    %v480 = vmul.f32 %v469, %v478
    %v481 = vmul.f32 %v470, %v479
    %v482 = vadd.f32 %v480, %v481
    %483 = vadd.xlane.f32.xlu0 %v482
    %v484 = vpop.xlane.xlu0 %483
    %s485 = sld [smem:[#allocation2]]
    %v486 = vstv %s485
    %v487 = vadd.f32 %v484, %v486
    %vm488 = vcmask 7168
    %489 = vst.msk [vmem:[%s9] sm:$0xff] %vm488, %v487
    // Predicated region
    $region58: #{tpu_custom_call.1} parent=1 // pred_check
      _
    $region59: #{tpu_custom_call.1} parent=1 // pred_check_branch
      %491 = sbr.rel (0) target = $region61
    $region60: #{tpu_custom_call.1} parent=1 // pred_region
      _
    $region61: #{tpu_custom_call.1} parent=1 // pred_fallthru
      _
    // Predicated region
    $region62: #{tpu_custom_call.1} parent=1 // pred_check
      _
    $region63: #{tpu_custom_call.1} parent=1 // pred_check_branch
      %493 = sbr.rel (0) target = $region65
    $region64: #{tpu_custom_call.1} parent=1 // pred_region
      _
    $region65: #{tpu_custom_call.1} parent=1 // pred_fallthru
      _
    %494 = vsyncpa [#allocation4], 1
    %495 = vsyncpa [#allocation6], 1
    %496 = vsyncpa [#allocation9], 1

</llo_original>
